<compile_context>
chip_gen: v7x
topology: tpu7x:2x2x1
jax: 0.10.0
libtpu: 0.0.40
codegen_flags: <defaults>
</compile_context>

<pallas_src>
import jax
import jax.numpy as jnp
from jax.experimental import pallas as pl
from jax.experimental.pallas import tpu as pltpu

# Minimum sublane tile per element byte-width (f32 -> 8, bf16 -> 16, i8/fp8 -> 32).
_SUBLANE = {4: 8, 2: 16, 1: 32}
_MAX_DMA_CHUNKS = 8            # spread large copies over several DMA engines
_MIN_BYTES_TO_CHUNK = 1 << 20  # below 1 MiB a single DMA is already optimal


def _chunk_plan(shape, itemsize):
    """Static (start, size) chunks along axis 0 for the HBM->HBM copy."""
    ndim = len(shape)
    lead = shape[0]
    total_bytes = itemsize
    for s in shape:
        total_bytes *= s
    if ndim < 2 or total_bytes < _MIN_BYTES_TO_CHUNK or lead < 2:
        return [(0, lead)]  # single whole-array DMA
    # Keep chunk boundaries on whole (sublane, lane) tiles when axis 0 is the
    # sublane dim (ndim == 2); for ndim >= 3 axis 0 is untiled.
    quantum = _SUBLANE.get(itemsize, 8) if ndim == 2 else 1
    chunk = -(-lead // _MAX_DMA_CHUNKS)      # cdiv(lead, max_chunks)
    chunk = -(-chunk // quantum) * quantum   # round up to the tile quantum
    chunk = min(chunk, lead)
    return [(s, min(chunk, lead - s)) for s in range(0, lead, chunk)]


def _make_dma_identity_kernel(chunks):
    """Kernel: issue all chunked HBM->HBM DMAs, then wait for every one."""
    whole = len(chunks) == 1

    def kernel(x_hbm, o_hbm, sems):
        if whole:
            copies = [pltpu.make_async_copy(x_hbm, o_hbm, sems.at[0])]
        else:
            copies = [
                pltpu.make_async_copy(
                    x_hbm.at[pl.ds(start, size)],
                    o_hbm.at[pl.ds(start, size)],
                    sems.at[k],
                )
                for k, (start, size) in enumerate(chunks)
            ]
        for cp in copies:   # launch everything first (overlap across engines)
            cp.start()
        for cp in copies:   # then drain
            cp.wait()

    return kernel


def identity_forward(x):
    """Identity forward pass; the copy runs as chunked HBM->HBM DMA."""
    if x.ndim == 0 or x.size == 0:
        # Nothing worth a device kernel; identity is exact either way.
        return x
    itemsize = jnp.dtype(x.dtype).itemsize
    chunks = _chunk_plan(x.shape, itemsize)
    kernel = _make_dma_identity_kernel(chunks)
    return pl.pallas_call(
        kernel,
        out_shape=jax.ShapeDtypeStruct(x.shape, x.dtype),
        in_specs=[pl.BlockSpec(memory_space=pl.ANY)],   # raw HBM ref, no auto-DMA
        out_specs=pl.BlockSpec(memory_space=pl.ANY),    # raw HBM ref, DMA'd into
        scratch_shapes=[pltpu.SemaphoreType.DMA((len(chunks),))],
    )(x)


class IdentityPallas:
    """Mirror of the PyTorch Identity module (no parameters)."""

    def __init__(self, d, materialize=True):
        self.in_features = d
        self.out_features = d
        # materialize=False is the unbeatable option (zero HBM traffic):
        # identity under jit is just `return x`.  The default keeps the
        # kernel path so a fresh, independent output buffer is produced.
        self._fwd = jax.jit(identity_forward if materialize else (lambda x: x))

    def __call__(self, x):
        return self._fwd(x)


if __name__ == "__main__":
    key = jax.random.PRNGKey(0)
    mod = IdentityPallas(d=4)

    # NCHW input: batch=2, channels=4, spatial=16 (single whole-array DMA).
    x = jax.random.normal(key, (2, 4, 16, 16), dtype=jnp.float32)
    y = jax.block_until_ready(mod(x))
    assert y.shape == x.shape and y.dtype == x.dtype
    assert bool(jnp.array_equal(y, x)), "identity output mismatch (f32 NCHW)"

    # bf16 path.
    xb = x.astype(jnp.bfloat16)
    yb = jax.block_until_ready(mod(xb))
    assert yb.shape == xb.shape and yb.dtype == xb.dtype
    assert bool(jnp.array_equal(yb, xb)), "identity output mismatch (bf16)"

    # Ragged shape: the DMA copies the padded HBM layout as-is, no fallback.
    xr = jax.random.normal(key, (3, 5, 7), dtype=jnp.float32)
    yr = jax.block_until_ready(mod(xr))
    assert yr.shape == xr.shape and yr.dtype == xr.dtype
    assert bool(jnp.array_equal(yr, xr)), "identity output mismatch (ragged)"

    # 2 MiB 2-D input: exercises the 8-way chunked DMA path (sublane-aligned).
    xl = jax.random.normal(key, (1024, 512), dtype=jnp.float32)
    yl = jax.block_until_ready(mod(xl))
    assert yl.shape == xl.shape and yl.dtype == xl.dtype
    assert bool(jnp.array_equal(yl, xl)), "identity output mismatch (chunked)"

    print("KERNEL_OK")
</pallas_src>

<mosaic_0001>
module attributes {stable_mosaic.version = 11 : i64} {
  func.func @kernel(%arg0: memref<2x4x16x16xf32, #tpu.memory_space<any>>, %arg1: memref<2x4x16x16xf32, #tpu.memory_space<any>>, %arg2: memref<1x!tpu.dma_semaphore, #tpu.memory_space<semaphore_mem>>) attributes {dimension_semantics = [], scalar_prefetch = 0 : i64, scratch_operands = 1 : i64, tpu.core_type = #tpu.core_type<tc>} {
    %c0_i32 = arith.constant 0 : i32
    %0 = tpu.memref_slice %arg2[%c0_i32] : memref<1x!tpu.dma_semaphore, #tpu.memory_space<semaphore_mem>> -> memref<1x!tpu.dma_semaphore, #tpu.memory_space<semaphore_mem>>
    %1 = tpu.memref_squeeze %0 : memref<1x!tpu.dma_semaphore, #tpu.memory_space<semaphore_mem>> -> memref<!tpu.dma_semaphore, #tpu.memory_space<semaphore_mem>>
    tpu.enqueue_dma source(%arg0 : memref<2x4x16x16xf32, #tpu.memory_space<any>>) target(%arg1 : memref<2x4x16x16xf32, #tpu.memory_space<any>>) target_semaphore(%1 : memref<!tpu.dma_semaphore, #tpu.memory_space<semaphore_mem>>)
    %c0_i32_0 = arith.constant 0 : i32
    %2 = tpu.memref_slice %arg2[%c0_i32_0] : memref<1x!tpu.dma_semaphore, #tpu.memory_space<semaphore_mem>> -> memref<1x!tpu.dma_semaphore, #tpu.memory_space<semaphore_mem>>
    %3 = tpu.memref_squeeze %2 : memref<1x!tpu.dma_semaphore, #tpu.memory_space<semaphore_mem>> -> memref<!tpu.dma_semaphore, #tpu.memory_space<semaphore_mem>>
    tpu.wait_dma2 semaphore(%3 : memref<!tpu.dma_semaphore, #tpu.memory_space<semaphore_mem>>) src(%arg0 : memref<2x4x16x16xf32, #tpu.memory_space<any>>) dst(%arg1 : memref<2x4x16x16xf32, #tpu.memory_space<any>>)
    return
  }
}

</mosaic_0001>

<llo_original>
// kernel: identity_forward.1
$region0: #{identity_forward.1}
  #allocation0 [shape = 'u32[]', space=smem, size = 0x4, offset = 0x4, fixed_abs, tag = 'smem constant byte address 0x4 - core index']
  #allocation1 [shape = 'u32[144,128]{1,0:T(1,128)}', space=vmem, size = 0x12000, scoped, tag = 'internal scratch']
  #allocation2 [shape = 's32[1]{0}', space=sflag, size = 0x4, scoped, tag = 'scratch operand']
  #allocation3 [shape = 's32[]', space=sflag, size = 0x4, offset = 0, fixed_abs, tag = 'sflag constant byte address 0x0 - dummy sync flag']
  #allocation4 [shape = 'u32[0]{0}', space=smem, size = 0, offset = 0, fixed_abs, tag = 'smem constant byte address 0x0 - null']
  %s0 = inlined_call_operand.hbm [shape: f32[2,4,16,16], index: 0, kind: input, shape index: {}]
  %s1 = inlined_call_operand.hbm [shape: f32[2,4,16,16], index: 1, kind: output, shape index: {}]
  %s2 = sld [smem:[#allocation0]]
  $region2: #{identity_forward.1} parent=0
    _
  %s4 = ssub.s32 1, %s2
  %s5 = scalar_select 0, %s4, %s2
  %s7 = sshll.u32 1, 14
  %s8 = sxor.u32 4294967295, %s7
  %s11 = sshll.u32 3, 24
  %s12 = sxor.u32 4294967295, %s11
  %s13 = sand.u32 0, %s12
  %s15 = sor.u32 %s13, 0
  %18 = dma.general %s0, 2048, %s1, [#allocation2], [#allocation3], [#allocation4], %s15, 0
  %s19 = smul.u32 2, 4
  %s20 = smul.u32 %s19, 16
  %s21 = smul.u32 %s20, 1
  %s22 = sshll.u32 %s21, 4
  %23 = dma.done [#allocation2], %s22
  %24 = vsyncmov [#allocation2]
  %s25 = vpop.sfrf %24
  %p26 = scmp.eq.s32.totalorder %s25, 0
  %p27 = pneg %p26
  %29 = shalt.err (%p27)

</llo_original>
